<compile_context>
chip_gen: v5e
topology: v5e:2x2
jax: 0.10.0
libtpu: 0.0.40
codegen_flags: <defaults>
</compile_context>

<pallas_src>
import math

import jax
import jax.numpy as jnp
from jax.experimental import pallas as pl
from jax.experimental.pallas import tpu as pltpu


def mlp_kernel(x_ref, w1_ref, b1_ref, w2_ref, b2_ref, w3_ref, b3_ref, o_ref):
    rows = o_ref.shape[0]              # TB // 128
    x = x_ref[...]                     # (TB, input_dim) bf16 (pre-cast in wrapper)

    # Layer 1: Linear (bf16 MXU, f32 accumulate) + bias + LeakyReLU (f32 VPU).
    h = jnp.dot(x, w1_ref[...], preferred_element_type=jnp.float32) + b1_ref[...]
    h = jnp.maximum(h, 0.01 * h)       # LeakyReLU, slope 0.01
    # BatchNorm1d #1 is folded into w2/b2; Dropout is identity in eval.

    # Layer 2: Linear + bias + LeakyReLU.
    h = jnp.dot(h.astype(jnp.bfloat16), w2_ref[...],
                preferred_element_type=jnp.float32) + b2_ref[...]
    h = jnp.maximum(h, 0.01 * h)
    # BatchNorm1d #2 is folded into w3/b3.

    # Head Linear(128 -> 1) on the MXU: group h into (rows, 128, 128) (a
    # layout-free sublane split) and contract the hidden dim against the
    # (1, 128) head row with a batched matmul.  Result (rows, 1, 128) is
    # lane-dense: out[r, 0, c] = sum_d w3[d] * h[r*128 + c, d].
    h_g = h.astype(jnp.bfloat16).reshape(rows, 128, 128)
    w3_b = jnp.broadcast_to(w3_ref[...], (rows, 1, 128))          # bf16
    head = jnp.einsum('bqd,bkd->bqk', w3_b, h_g,
                      preferred_element_type=jnp.float32)          # (rows,1,128)
    o_ref[...] = head + b3_ref[...]


def _round_up(n, m):
    return ((n + m - 1) // m) * m


def minimalistic_network_forward(x, kernel_params, *, block_batch=8192):
    """Eval-mode forward. x: [B, input_dim] f32 -> [B, 1] f32."""
    w1, b1, w2, b2, w3_k, b3_k = kernel_params
    B, K = x.shape

    # Pre-cast the input to bf16 (halves HBM input bytes; mainly helps v5e).
    x = x.astype(jnp.bfloat16)

    # Batch tile: multiple of 128.  Cap so the grid has >= 2 steps whenever the
    # batch allows (keeps both v7x TensorCores busy); keep block_batch <= 8192
    # so the tile stays comfortably inside v7x's smaller VMEM.
    B_128 = _round_up(B, 128)
    max_tb = B_128 if B_128 < 256 else _round_up(B_128 // 2, 128)
    TB = max(128, min(_round_up(block_batch, 128), max_tb))
    B_pad = _round_up(B, TB)
    if B_pad != B:
        x = jnp.pad(x, ((0, B_pad - B), (0, 0)))

    grid = (B_pad // TB,)
    rows = TB // 128

    def const(shape):
        # Whole-array block, same block every grid step -> stays VMEM-resident.
        return pl.BlockSpec(shape, lambda i, _n=len(shape): (0,) * _n)

    out_slab = pl.pallas_call(
        mlp_kernel,
        out_shape=jax.ShapeDtypeStruct((B_pad // 128, 1, 128), jnp.float32),
        grid=grid,
        in_specs=[
            pl.BlockSpec((TB, K), lambda i: (i, 0)),   # x: batch-tiled, bf16
            const(w1.shape), const(b1.shape),          # layer 1
            const(w2.shape), const(b2.shape),          # layer 2 (BN1 folded)
            const(w3_k.shape), const(b3_k.shape),      # head   (BN2 folded)
        ],
        out_specs=pl.BlockSpec((rows, 1, 128), lambda i: (i, 0, 0)),  # lane-dense
        compiler_params=pltpu.CompilerParams(
            dimension_semantics=("parallel",),
            vmem_limit_bytes=32 * 1024 * 1024,
        ),
    )(x, w1, b1, w2, b2, w3_k, b3_k)

    # Slab element (r, 0, c)  <->  batch row r*128 + c, single output feature.
    return out_slab.reshape(B_pad, 1)[:B]


# ----------------------------------------------------------------------------
# Parameter construction (mirrors the PyTorch module's init) + BN folding.
# ----------------------------------------------------------------------------

def xavier_uniform(key, fan_in, fan_out):
    # torch.nn.init.xavier_uniform_ on weight [out, in]; stored here as [in, out].
    bound = math.sqrt(6.0 / (fan_in + fan_out))
    return jax.random.uniform(key, (fan_in, fan_out), jnp.float32, -bound, bound)


def linear_bias(key, fan_in, fan_out):
    bound = 1.0 / math.sqrt(fan_in)
    return jax.random.uniform(key, (1, fan_out), jnp.float32, -bound, bound)


def make_torch_like_params(key, input_dim=15, inner_dim=128):
    """Raw parameters matching the PyTorch module (with non-trivial BN stats)."""
    ks = jax.random.split(key, 14)
    w1 = xavier_uniform(ks[0], input_dim, inner_dim)
    b1 = linear_bias(ks[1], input_dim, inner_dim)
    w2 = xavier_uniform(ks[2], inner_dim, inner_dim)
    b2 = linear_bias(ks[3], inner_dim, inner_dim)
    w3 = xavier_uniform(ks[4], inner_dim, 1)          # (128, 1)
    b3 = linear_bias(ks[5], inner_dim, 1)             # (1, 1)
    # BatchNorm1d params/stats (as after some training, to exercise the fold;
    # PyTorch defaults would be gamma=1, beta=0, mean=0, var=1).
    g1 = jax.random.uniform(ks[6], (1, inner_dim), jnp.float32, 0.5, 1.5)
    be1 = 0.1 * jax.random.normal(ks[7], (1, inner_dim), jnp.float32)
    m1 = 0.1 * jax.random.normal(ks[8], (1, inner_dim), jnp.float32)
    v1 = jax.random.uniform(ks[9], (1, inner_dim), jnp.float32, 0.5, 1.5)
    g2 = jax.random.uniform(ks[10], (1, inner_dim), jnp.float32, 0.5, 1.5)
    be2 = 0.1 * jax.random.normal(ks[11], (1, inner_dim), jnp.float32)
    m2 = 0.1 * jax.random.normal(ks[12], (1, inner_dim), jnp.float32)
    v2 = jax.random.uniform(ks[13], (1, inner_dim), jnp.float32, 0.5, 1.5)
    return (w1, b1, w2, b2, w3, b3, g1, be1, m1, v1, g2, be2, m2, v2)


def prepare_kernel_params(raw, eps=1e-5):
    """Fold eval-mode BatchNorm affines into the following Linear layers and
    cast the matmul weights to bf16.

    Note: if running variances were pathologically small, the bf16 rounding of
    the folded scales could grow the error; with realistic stats it is well
    inside the bf16-matmul tolerance used below.
    """
    (w1, b1, w2, b2, w3, b3, g1, be1, m1, v1, g2, be2, m2, v2) = raw
    s1 = g1 / jnp.sqrt(v1 + eps)
    t1 = be1 - m1 * s1
    s2 = g2 / jnp.sqrt(v2 + eps)
    t2 = be2 - m2 * s2
    # BN1 sits between LeakyReLU and Linear2:  (a*s1 + t1) @ W2 + b2
    #   = a @ (diag(s1) W2) + (t1 @ W2 + b2)
    w2f = s1.T * w2                       # (128, 128): scale input rows
    b2f = b2 + t1 @ w2                    # (1, 128)
    # BN2 folded into the head; head weight kept as a (1, 1, 128) lane row so
    # the kernel's batched MXU contraction lands lane-dense.
    w3_row = (s2 * w3.T).reshape(1, 1, 128)         # (1, 1, 128)
    b3_scalar = b3 + t2 @ w3                         # (1, 1)
    b3_k = jnp.broadcast_to(b3_scalar, (1, 128)).reshape(1, 1, 128)
    return (w1.astype(jnp.bfloat16), b1.astype(jnp.float32),
            w2f.astype(jnp.bfloat16), b2f.astype(jnp.float32),
            w3_row.astype(jnp.bfloat16), b3_k.astype(jnp.float32))


def reference_forward(x, raw, eps=1e-5):
    """Pure-JAX f32 reference of the eval-mode PyTorch forward (no folding)."""
    (w1, b1, w2, b2, w3, b3, g1, be1, m1, v1, g2, be2, m2, v2) = raw
    leaky = lambda h: jnp.where(h >= 0, h, 0.01 * h)
    bn = lambda h, g, be, m, v: (h - m) / jnp.sqrt(v + eps) * g + be
    h = bn(leaky(x @ w1 + b1), g1, be1, m1, v1)   # Dropout: identity in eval
    h = bn(leaky(h @ w2 + b2), g2, be2, m2, v2)
    return h @ w3 + b3


if __name__ == "__main__":
    key = jax.random.PRNGKey(0)
    k_param, k_x = jax.random.split(key)

    input_dim, inner_dim, batch = 15, 128, 8
    raw = make_torch_like_params(k_param, input_dim, inner_dim)
    params = prepare_kernel_params(raw)
    x = jax.random.normal(k_x, (batch, input_dim), jnp.float32)

    out = minimalistic_network_forward(x, params)
    out = jax.block_until_ready(out)

    ref = reference_forward(x, raw)
    assert out.shape == (batch, 1)
    # bf16 inputs/matmuls -> loose tolerance vs. the f32 reference.
    assert jnp.allclose(out, ref, atol=5e-2, rtol=5e-2), \
        float(jnp.max(jnp.abs(out - ref)))

    print("KERNEL_OK")
</pallas_src>

<mosaic_0001>
module attributes {stable_mosaic.version = 11 : i64} {
  func.func @mlp_kernel(%arg0: i32, %arg1: memref<128x15xbf16, #tpu.memory_space<vmem>>, %arg2: memref<15x128xbf16, #tpu.memory_space<vmem>>, %arg3: memref<1x128xf32, #tpu.memory_space<vmem>>, %arg4: memref<128x128xbf16, #tpu.memory_space<vmem>>, %arg5: memref<1x128xf32, #tpu.memory_space<vmem>>, %arg6: memref<1x1x128xbf16, #tpu.memory_space<vmem>>, %arg7: memref<1x1x128xf32, #tpu.memory_space<vmem>>, %arg8: memref<1x1x128xf32, #tpu.memory_space<vmem>>) attributes {dimension_semantics = [#tpu.dimension_semantics<parallel>], iteration_bounds = array<i64: 1>, scalar_prefetch = 0 : i64, scratch_operands = 0 : i64, tpu.core_type = #tpu.core_type<tc>, window_params = [{transform_indices = @transform_0, window_bounds = array<i64: 128, 15>}, {pipeline_mode = #tpu.pipeline_mode<synchronous>, transform_indices = @transform_1, window_bounds = array<i64: 15, 128>}, {pipeline_mode = #tpu.pipeline_mode<synchronous>, transform_indices = @transform_2, window_bounds = array<i64: 1, 128>}, {pipeline_mode = #tpu.pipeline_mode<synchronous>, transform_indices = @transform_3, window_bounds = array<i64: 128, 128>}, {pipeline_mode = #tpu.pipeline_mode<synchronous>, transform_indices = @transform_4, window_bounds = array<i64: 1, 128>}, {pipeline_mode = #tpu.pipeline_mode<synchronous>, transform_indices = @transform_5, window_bounds = array<i64: 1, 1, 128>}, {pipeline_mode = #tpu.pipeline_mode<synchronous>, transform_indices = @transform_6, window_bounds = array<i64: 1, 1, 128>}, {transform_indices = @transform_7, window_bounds = array<i64: 1, 1, 128>}]} {
    %c0 = arith.constant 0 : index
    %c0_0 = arith.constant 0 : index
    %0 = vector.load %arg1[%c0, %c0_0] : memref<128x15xbf16, #tpu.memory_space<vmem>>, vector<128x15xbf16>
    %c0_1 = arith.constant 0 : index
    %c0_2 = arith.constant 0 : index
    %1 = vector.load %arg2[%c0_1, %c0_2] : memref<15x128xbf16, #tpu.memory_space<vmem>>, vector<15x128xbf16>
    %cst = arith.constant dense<0.000000e+00> : vector<128x128xf32>
    %2 = tpu.matmul %0, %1, %cst {dimension_numbers = #tpu.dot_dimension_numbers<[1], [0], [0], [1], [0, 0, 1, 1], [], []>} : vector<128x15xbf16>, vector<15x128xbf16>, vector<128x128xf32> -> vector<128x128xf32>
    %c0_3 = arith.constant 0 : index
    %c0_4 = arith.constant 0 : index
    %3 = vector.load %arg3[%c0_3, %c0_4] : memref<1x128xf32, #tpu.memory_space<vmem>>, vector<1x128xf32>
    %4 = vector.broadcast %3 : vector<1x128xf32> to vector<128x128xf32>
    %5 = arith.addf %2, %4 : vector<128x128xf32>
    %cst_5 = arith.constant 0.00999999977 : f32
    %6 = vector.broadcast %cst_5 : f32 to vector<128x128xf32>
    %7 = arith.mulf %6, %5 : vector<128x128xf32>
    %8 = arith.maximumf %5, %7 : vector<128x128xf32>
    %9 = arith.truncf %8 : vector<128x128xf32> to vector<128x128xbf16>
    %c0_6 = arith.constant 0 : index
    %c0_7 = arith.constant 0 : index
    %10 = vector.load %arg4[%c0_6, %c0_7] : memref<128x128xbf16, #tpu.memory_space<vmem>>, vector<128x128xbf16>
    %cst_8 = arith.constant dense<0.000000e+00> : vector<128x128xf32>
    %11 = tpu.matmul %9, %10, %cst_8 {dimension_numbers = #tpu.dot_dimension_numbers<[1], [0], [0], [1], [0, 0, 1, 1], [], []>} : vector<128x128xbf16>, vector<128x128xbf16>, vector<128x128xf32> -> vector<128x128xf32>
    %c0_9 = arith.constant 0 : index
    %c0_10 = arith.constant 0 : index
    %12 = vector.load %arg5[%c0_9, %c0_10] : memref<1x128xf32, #tpu.memory_space<vmem>>, vector<1x128xf32>
    %13 = vector.broadcast %12 : vector<1x128xf32> to vector<128x128xf32>
    %14 = arith.addf %11, %13 : vector<128x128xf32>
    %cst_11 = arith.constant 0.00999999977 : f32
    %15 = vector.broadcast %cst_11 : f32 to vector<128x128xf32>
    %16 = arith.mulf %15, %14 : vector<128x128xf32>
    %17 = arith.maximumf %14, %16 : vector<128x128xf32>
    %18 = arith.truncf %17 : vector<128x128xf32> to vector<128x128xbf16>
    %19 = vector.shape_cast %18 : vector<128x128xbf16> to vector<1x128x128xbf16>
    %c0_12 = arith.constant 0 : index
    %c0_13 = arith.constant 0 : index
    %c0_14 = arith.constant 0 : index
    %20 = vector.load %arg6[%c0_12, %c0_13, %c0_14] : memref<1x1x128xbf16, #tpu.memory_space<vmem>>, vector<1x1x128xbf16>
    "tpu.trace_start"() <{level = 10 : i32, message = "bqd,bkd->bqk"}> : () -> ()
    %cst_15 = arith.constant dense<0.000000e+00> : vector<1x1x128xf32>
    %21 = tpu.matmul %20, %19, %cst_15 {dimension_numbers = #tpu.dot_dimension_numbers<[2], [2], [1], [1], [0, 0, 0, 1, 1, 1], [0], [0]>} : vector<1x1x128xbf16>, vector<1x128x128xbf16>, vector<1x1x128xf32> -> vector<1x1x128xf32>
    "tpu.trace_stop"() : () -> ()
    %c0_16 = arith.constant 0 : index
    %c0_17 = arith.constant 0 : index
    %c0_18 = arith.constant 0 : index
    %22 = vector.load %arg7[%c0_16, %c0_17, %c0_18] : memref<1x1x128xf32, #tpu.memory_space<vmem>>, vector<1x1x128xf32>
    %23 = arith.addf %21, %22 : vector<1x1x128xf32>
    %c0_19 = arith.constant 0 : index
    %c0_20 = arith.constant 0 : index
    %c0_21 = arith.constant 0 : index
    %24 = vector.load %arg8[%c0_19, %c0_20, %c0_21] : memref<1x1x128xf32, #tpu.memory_space<vmem>>, vector<1x1x128xf32>
    tpu.vector_store %arg8[%c0_19, %c0_20, %c0_21], %23 {strides = array<i32>} : memref<1x1x128xf32, #tpu.memory_space<vmem>>, vector<1x1x128xf32>,
    return
  }
  func.func @transform_0(%arg0: i32) -> (i32, i32) {
    %c0_i32 = arith.constant 0 : i32
    %c0_i32_0 = arith.constant 0 : i32
    return %arg0, %c0_i32 : i32, i32
  }
  func.func @transform_1(%arg0: i32) -> (i32, i32) {
    %c0_i32 = arith.constant 0 : i32
    %c0_i32_0 = arith.constant 0 : i32
    %c0_i32_1 = arith.constant 0 : i32
    return %c0_i32, %c0_i32_0 : i32, i32
  }
  func.func @transform_2(%arg0: i32) -> (i32, i32) {
    %c0_i32 = arith.constant 0 : i32
    %c0_i32_0 = arith.constant 0 : i32
    %c0_i32_1 = arith.constant 0 : i32
    return %c0_i32, %c0_i32_0 : i32, i32
  }
  func.func @transform_3(%arg0: i32) -> (i32, i32) {
    %c0_i32 = arith.constant 0 : i32
    %c0_i32_0 = arith.constant 0 : i32
    %c0_i32_1 = arith.constant 0 : i32
    return %c0_i32, %c0_i32_0 : i32, i32
  }
  func.func @transform_4(%arg0: i32) -> (i32, i32) {
    %c0_i32 = arith.constant 0 : i32
    %c0_i32_0 = arith.constant 0 : i32
    %c0_i32_1 = arith.constant 0 : i32
    return %c0_i32, %c0_i32_0 : i32, i32
  }
  func.func @transform_5(%arg0: i32) -> (i32, i32, i32) {
    %c0_i32 = arith.constant 0 : i32
    %c0_i32_0 = arith.constant 0 : i32
    %c0_i32_1 = arith.constant 0 : i32
    %c0_i32_2 = arith.constant 0 : i32
    return %c0_i32, %c0_i32_0, %c0_i32_1 : i32, i32, i32
  }
  func.func @transform_6(%arg0: i32) -> (i32, i32, i32) {
    %c0_i32 = arith.constant 0 : i32
    %c0_i32_0 = arith.constant 0 : i32
    %c0_i32_1 = arith.constant 0 : i32
    %c0_i32_2 = arith.constant 0 : i32
    return %c0_i32, %c0_i32_0, %c0_i32_1 : i32, i32, i32
  }
  func.func @transform_7(%arg0: i32) -> (i32, i32, i32) {
    %c0_i32 = arith.constant 0 : i32
    %c0_i32_0 = arith.constant 0 : i32
    %c0_i32_1 = arith.constant 0 : i32
    return %arg0, %c0_i32, %c0_i32_0 : i32, i32, i32
  }
}

</mosaic_0001>

<llo_original>
// kernel: tpu_custom_call.1
$region0: #{tpu_custom_call.1}
  #allocation0 [shape = 'u32[]', space=smem, size = 0x4, offset = 0x4, fixed_abs, tag = 'smem constant byte address 0x4 - core index']
  #allocation1 [shape = 'u32[72,128]{1,0:T(1,128)}', space=vmem, size = 0x9000, scoped, tag = 'internal scratch']
  %s0 = inlined_call_operand.vmem [shape: bf16[128,15], index: 0, kind: input, shape index: {}]
  %s1 = inlined_call_operand.vmem [shape: bf16[15,128], index: 1, kind: input, shape index: {}]
  %s2 = inlined_call_operand.vmem [shape: f32[1,128], index: 2, kind: input, shape index: {}]
  %s3 = inlined_call_operand.vmem [shape: bf16[128,128], index: 3, kind: input, shape index: {}]
  %s4 = inlined_call_operand.vmem [shape: f32[1,128], index: 4, kind: input, shape index: {}]
  %s5 = inlined_call_operand.vmem [shape: bf16[1,1,128], index: 5, kind: input, shape index: {}]
  %s6 = inlined_call_operand.vmem [shape: f32[1,1,128], index: 6, kind: input, shape index: {}]
  %s7 = inlined_call_operand.hbm [shape: f32[1,1,128], index: 7, kind: output, shape index: {}]
  %s8 = sld [smem:[#allocation0]]
  $region38: #{tpu_custom_call.1} parent=0
    _
  %s10 = ssub.s32 1, %s8
  %s11 = scalar_select 0, %s10, %s8
  $region1: #{tpu_custom_call.1} parent=0
    #allocation2 [shape = 'u8[512]{0}', space=vmem, size = 0x400, scoped, tag = 'output window, operand 0, single buffered']
    #allocation3 [shape = 's32[1]{0}', space=sflag, size = 0x4, scoped, tag = 'scoped memory for tpu_custom_call.1']
    %12 = vsyncpa [#allocation3], 0
    // Predicated region
    $region2: #{tpu_custom_call.1} parent=1 // pred_check
      _
    $region3: #{tpu_custom_call.1} parent=1 // pred_check_branch
      %14 = sbr.rel (0) target = $region5
    $region4: #{tpu_custom_call.1} parent=1 // pred_region
      _
    $region5: #{tpu_custom_call.1} parent=1 // pred_fallthru
      _
    // Predicated region
    $region6: #{tpu_custom_call.1} parent=1 // pred_check
      _
    $region7: #{tpu_custom_call.1} parent=1 // pred_check_branch
      %16 = sbr.rel (0) target = $region9
    $region8: #{tpu_custom_call.1} parent=1 // pred_region
      _
    $region9: #{tpu_custom_call.1} parent=1 // pred_fallthru
      _
    // Predicated region
    $region10: #{tpu_custom_call.1} parent=1 // pred_check
      _
    $region11: #{tpu_custom_call.1} parent=1 // pred_check_branch
      %18 = sbr.rel (0) target = $region13
    $region12: #{tpu_custom_call.1} parent=1 // pred_region
      _
    $region13: #{tpu_custom_call.1} parent=1 // pred_fallthru
      _
    // Predicated region
    $region14: #{tpu_custom_call.1} parent=1 // pred_check
      _
    $region15: #{tpu_custom_call.1} parent=1 // pred_check_branch
      %20 = sbr.rel (0) target = $region17
    $region16: #{tpu_custom_call.1} parent=1 // pred_region
      _
    $region17: #{tpu_custom_call.1} parent=1 // pred_fallthru
      _
    // Predicated region
    $region18: #{tpu_custom_call.1} parent=1 // pred_check
      _
    $region19: #{tpu_custom_call.1} parent=1 // pred_check_branch
      %22 = sbr.rel (0) target = $region21
    $region20: #{tpu_custom_call.1} parent=1 // pred_region
      _
    $region21: #{tpu_custom_call.1} parent=1 // pred_fallthru
      _
    // Predicated region
    $region22: #{tpu_custom_call.1} parent=1 // pred_check
      _
    $region23: #{tpu_custom_call.1} parent=1 // pred_check_branch
      %24 = sbr.rel (0) target = $region25
    $region24: #{tpu_custom_call.1} parent=1 // pred_region
      _
    $region25: #{tpu_custom_call.1} parent=1 // pred_fallthru
      _
    // Predicated region
    $region26: #{tpu_custom_call.1} parent=1 // pred_check
      _
    $region27: #{tpu_custom_call.1} parent=1 // pred_check_branch
      %26 = sbr.rel (0) target = $region29
    $region28: #{tpu_custom_call.1} parent=1 // pred_region
      _
    $region29: #{tpu_custom_call.1} parent=1 // pred_fallthru
      _
    %v28 = vld [vmem:[%s0] sm:$0xf]
    %v29 = vld [vmem:[%s0 + $0x4] sm:$0xf]
    %v30 = vld [vmem:[%s0 + $0x8] sm:$0xf]
    %v31 = vld [vmem:[%s0 + $0xc] sm:$0xf]
    %v32 = vld [vmem:[%s0 + $0x10] sm:$0xf]
    %v33 = vld [vmem:[%s0 + $0x14] sm:$0xf]
    %v34 = vld [vmem:[%s0 + $0x18] sm:$0xf]
    %v35 = vld [vmem:[%s0 + $0x1c] sm:$0xf]
    %v36 = vld [vmem:[%s0 + $0x20] sm:$0xf]
    %v37 = vld [vmem:[%s0 + $0x24] sm:$0xf]
    %v38 = vld [vmem:[%s0 + $0x28] sm:$0xf]
    %v39 = vld [vmem:[%s0 + $0x2c] sm:$0xf]
    %v40 = vld [vmem:[%s0 + $0x30] sm:$0xf]
    %v41 = vld [vmem:[%s0 + $0x34] sm:$0xf]
    %v42 = vld [vmem:[%s0 + $0x38] sm:$0xf]
    %v43 = vld [vmem:[%s0 + $0x3c] sm:$0xf]
    %v44 = vld [vmem:[%s1] sm:$0xf]
    %v45 = vld [vmem:[%s1 + $0x4] sm:$0xf]
    %v46 = vld [vmem:[%s2] sm:$0x1]
    %v48 = vperm.slane %v46, 0
    %v66 = vunpack.c.l.b16 %v28
    %v67 = vunpack.c.l.b16 %v29
    %v68 = vunpack.c.l.b16 %v30
    %v69 = vunpack.c.l.b16 %v31
    %v70 = vunpack.c.l.b16 %v32
    %v71 = vunpack.c.l.b16 %v33
    %v72 = vunpack.c.l.b16 %v34
    %v73 = vunpack.c.l.b16 %v35
    %v74 = vunpack.c.l.b16 %v36
    %v75 = vunpack.c.l.b16 %v37
    %v76 = vunpack.c.l.b16 %v38
    %v77 = vunpack.c.l.b16 %v39
    %v78 = vunpack.c.l.b16 %v40
    %v79 = vunpack.c.l.b16 %v41
    %v80 = vunpack.c.l.b16 %v42
    %v81 = vunpack.c.l.b16 %v43
    %v82 = vpack.c.b16 %v67, %v66
    %v83 = vpack.c.b16 %v69, %v68
    %v84 = vpack.c.b16 %v71, %v70
    %v85 = vpack.c.b16 %v73, %v72
    %v86 = vpack.c.b16 %v75, %v74
    %v87 = vpack.c.b16 %v77, %v76
    %v88 = vpack.c.b16 %v79, %v78
    %v89 = vpack.c.b16 %v81, %v80
    %v92 = vunpack.c.l.b16 %v44
    %v93 = vunpack.c.l.b16 %v45
    %v94 = vpack.c.b16 %v93, %v92
    %vm95 = vcmask 121856
    %v97 = vsel %vm95, %v82, 0
    %v100 = vsel %vm95, %v83, 0
    %v103 = vsel %vm95, %v84, 0
    %v106 = vsel %vm95, %v85, 0
    %v109 = vsel %vm95, %v86, 0
    %v112 = vsel %vm95, %v87, 0
    %v115 = vsel %vm95, %v88, 0
    %v118 = vsel %vm95, %v89, 0
    %vm120 = vcmask 1046528
    %vm121 = vcmask 1047552
    %v122 = vsel %vm120, 4294967295, 65535
    %v123 = vsel %vm121, %v122, 0
    %v125 = vand.u32 %v94, %v123
    %127 = vmatpush.bf16.msra.mxu0 0
    %128 = vmatpush.bf16.msra.mxu0 0
    %129 = vmatpush.bf16.msra.mxu0 0
    %130 = vmatpush.bf16.msra.mxu0 0
    %131 = vmatpush.bf16.msra.mxu0 0
    %132 = vmatpush.bf16.msra.mxu0 0
    %133 = vmatpush.bf16.msra.mxu0 0
    %134 = vmatpush.bf16.msra.mxu0 %v125
    %135 = vmatmul.bf16.gmra.mxu0 %v97
    %v136 = vpop.f32.mrf.mxu0
    %v137 = vadd.f32 %v48, %v136
    %v138 = vpop.f32.mrf.mxu0
    %v139 = vadd.f32 %v48, %v138
    %140 = vmatmul.bf16.gmra.mxu0 %v100
    %v141 = vpop.f32.mrf.mxu0
    %v142 = vadd.f32 %v48, %v141
    %v143 = vpop.f32.mrf.mxu0
    %v144 = vadd.f32 %v48, %v143
    %145 = vmatmul.bf16.gmra.mxu0 %v103
    %v146 = vpop.f32.mrf.mxu0
    %v147 = vadd.f32 %v48, %v146
    %v148 = vpop.f32.mrf.mxu0
    %v149 = vadd.f32 %v48, %v148
    %150 = vmatmul.bf16.gmra.mxu0 %v106
    %v151 = vpop.f32.mrf.mxu0
    %v152 = vadd.f32 %v48, %v151
    %v153 = vpop.f32.mrf.mxu0
    %v154 = vadd.f32 %v48, %v153
    %155 = vmatmul.bf16.gmra.mxu0 %v109
    %v156 = vpop.f32.mrf.mxu0
    %v157 = vadd.f32 %v48, %v156
    %v158 = vpop.f32.mrf.mxu0
    %v159 = vadd.f32 %v48, %v158
    %160 = vmatmul.bf16.gmra.mxu0 %v112
    %v161 = vpop.f32.mrf.mxu0
    %v162 = vadd.f32 %v48, %v161
    %v163 = vpop.f32.mrf.mxu0
    %v164 = vadd.f32 %v48, %v163
    %165 = vmatmul.bf16.gmra.mxu0 %v115
    %v166 = vpop.f32.mrf.mxu0
    %v167 = vadd.f32 %v48, %v166
    %v168 = vpop.f32.mrf.mxu0
    %v169 = vadd.f32 %v48, %v168
    %170 = vmatmul.bf16.gmra.mxu0 %v118
    %v171 = vpop.f32.mrf.mxu0
    %v172 = vadd.f32 %v48, %v171
    %v173 = vpop.f32.mrf.mxu0
    %v174 = vadd.f32 %v48, %v173
    %175 = vdwg.mxu0
    %v176 = vmul.f32 %v137, 0.01
    %v177 = vmul.f32 %v139, 0.01
    %v178 = vmul.f32 %v142, 0.01
    %v179 = vmul.f32 %v144, 0.01
    %v180 = vmul.f32 %v147, 0.01
    %v181 = vmul.f32 %v149, 0.01
    %v182 = vmul.f32 %v152, 0.01
    %v183 = vmul.f32 %v154, 0.01
    %v184 = vmul.f32 %v157, 0.01
    %v185 = vmul.f32 %v159, 0.01
    %v186 = vmul.f32 %v162, 0.01
    %v187 = vmul.f32 %v164, 0.01
    %v188 = vmul.f32 %v167, 0.01
    %v189 = vmul.f32 %v169, 0.01
    %v190 = vmul.f32 %v172, 0.01
    %v191 = vmul.f32 %v174, 0.01
    %v192 = vmax.f32 %v137, %v176
    %v193 = vmax.f32 %v139, %v177
    %v194 = vmax.f32 %v142, %v178
    %v195 = vmax.f32 %v144, %v179
    %v196 = vmax.f32 %v147, %v180
    %v197 = vmax.f32 %v149, %v181
    %v198 = vmax.f32 %v152, %v182
    %v199 = vmax.f32 %v154, %v183
    %v200 = vmax.f32 %v157, %v184
    %v201 = vmax.f32 %v159, %v185
    %v202 = vmax.f32 %v162, %v186
    %v203 = vmax.f32 %v164, %v187
    %v204 = vmax.f32 %v167, %v188
    %v205 = vmax.f32 %v169, %v189
    %v206 = vmax.f32 %v172, %v190
    %v207 = vmax.f32 %v174, %v191
    %v208 = vpack.c.bf16 %v193, %v192
    %v209 = vpack.c.bf16 %v195, %v194
    %v210 = vpack.c.bf16 %v197, %v196
    %v211 = vpack.c.bf16 %v199, %v198
    %v212 = vpack.c.bf16 %v201, %v200
    %v213 = vpack.c.bf16 %v203, %v202
    %v214 = vpack.c.bf16 %v205, %v204
    %v215 = vpack.c.bf16 %v207, %v206
    %v216 = vld [vmem:[%s3] sm:$0xf]
    %v217 = vld [vmem:[%s3 + $0x4] sm:$0xf]
    %v218 = vld [vmem:[%s3 + $0x8] sm:$0xf]
    %v219 = vld [vmem:[%s3 + $0xc] sm:$0xf]
    %v220 = vld [vmem:[%s3 + $0x10] sm:$0xf]
    %v221 = vld [vmem:[%s3 + $0x14] sm:$0xf]
    %v222 = vld [vmem:[%s3 + $0x18] sm:$0xf]
    %v223 = vld [vmem:[%s3 + $0x1c] sm:$0xf]
    %v224 = vld [vmem:[%s3 + $0x20] sm:$0xf]
    %v225 = vld [vmem:[%s3 + $0x24] sm:$0xf]
    %v226 = vld [vmem:[%s3 + $0x28] sm:$0xf]
    %v227 = vld [vmem:[%s3 + $0x2c] sm:$0xf]
    %v228 = vld [vmem:[%s3 + $0x30] sm:$0xf]
    %v229 = vld [vmem:[%s3 + $0x34] sm:$0xf]
    %v230 = vld [vmem:[%s3 + $0x38] sm:$0xf]
    %v231 = vld [vmem:[%s3 + $0x3c] sm:$0xf]
    %v232 = vld [vmem:[%s4] sm:$0x1]
    %v234 = vperm.slane %v232, 0
    %v252 = vunpack.c.l.b16 %v216
    %v253 = vunpack.c.l.b16 %v217
    %v254 = vunpack.c.l.b16 %v218
    %v255 = vunpack.c.l.b16 %v219
    %v256 = vunpack.c.l.b16 %v220
    %v257 = vunpack.c.l.b16 %v221
    %v258 = vunpack.c.l.b16 %v222
    %v259 = vunpack.c.l.b16 %v223
    %v260 = vunpack.c.l.b16 %v224
    %v261 = vunpack.c.l.b16 %v225
    %v262 = vunpack.c.l.b16 %v226
    %v263 = vunpack.c.l.b16 %v227
    %v264 = vunpack.c.l.b16 %v228
    %v265 = vunpack.c.l.b16 %v229
    %v266 = vunpack.c.l.b16 %v230
    %v267 = vunpack.c.l.b16 %v231
    %v268 = vpack.c.b16 %v253, %v252
    %v269 = vpack.c.b16 %v255, %v254
    %v270 = vpack.c.b16 %v257, %v256
    %v271 = vpack.c.b16 %v259, %v258
    %v272 = vpack.c.b16 %v261, %v260
    %v273 = vpack.c.b16 %v263, %v262
    %v274 = vpack.c.b16 %v265, %v264
    %v275 = vpack.c.b16 %v267, %v266
    %284 = vmatpush.bf16.msra.mxu0 %v275
    %285 = vmatpush.bf16.msra.mxu0 %v274
    %286 = vmatpush.bf16.msra.mxu0 %v273
    %287 = vmatpush.bf16.msra.mxu0 %v272
    %288 = vmatpush.bf16.msra.mxu0 %v271
    %289 = vmatpush.bf16.msra.mxu0 %v270
    %290 = vmatpush.bf16.msra.mxu0 %v269
    %291 = vmatpush.bf16.msra.mxu0 %v268
    %292 = vmatmul.bf16.gmra.mxu0 %v208
    %v293 = vpop.f32.mrf.mxu0
    %v294 = vadd.f32 %v234, %v293
    %v295 = vpop.f32.mrf.mxu0
    %v296 = vadd.f32 %v234, %v295
    %297 = vmatmul.bf16.gmra.mxu0 %v209
    %v298 = vpop.f32.mrf.mxu0
    %v299 = vadd.f32 %v234, %v298
    %v300 = vpop.f32.mrf.mxu0
    %v301 = vadd.f32 %v234, %v300
    %302 = vmatmul.bf16.gmra.mxu0 %v210
    %v303 = vpop.f32.mrf.mxu0
    %v304 = vadd.f32 %v234, %v303
    %v305 = vpop.f32.mrf.mxu0
    %v306 = vadd.f32 %v234, %v305
    %307 = vmatmul.bf16.gmra.mxu0 %v211
    %v308 = vpop.f32.mrf.mxu0
    %v309 = vadd.f32 %v234, %v308
    %v310 = vpop.f32.mrf.mxu0
    %v311 = vadd.f32 %v234, %v310
    %312 = vmatmul.bf16.gmra.mxu0 %v212
    %v313 = vpop.f32.mrf.mxu0
    %v314 = vadd.f32 %v234, %v313
    %v315 = vpop.f32.mrf.mxu0
    %v316 = vadd.f32 %v234, %v315
    %317 = vmatmul.bf16.gmra.mxu0 %v213
    %v318 = vpop.f32.mrf.mxu0
    %v319 = vadd.f32 %v234, %v318
    %v320 = vpop.f32.mrf.mxu0
    %v321 = vadd.f32 %v234, %v320
    %322 = vmatmul.bf16.gmra.mxu0 %v214
    %v323 = vpop.f32.mrf.mxu0
    %v324 = vadd.f32 %v234, %v323
    %v325 = vpop.f32.mrf.mxu0
    %v326 = vadd.f32 %v234, %v325
    %327 = vmatmul.bf16.gmra.mxu0 %v215
    %v328 = vpop.f32.mrf.mxu0
    %v329 = vadd.f32 %v234, %v328
    %v330 = vpop.f32.mrf.mxu0
    %v331 = vadd.f32 %v234, %v330
    %332 = vdwg.mxu0
    %v333 = vmul.f32 %v294, 0.01
    %v334 = vmul.f32 %v296, 0.01
    %v335 = vmul.f32 %v299, 0.01
    %v336 = vmul.f32 %v301, 0.01
    %v337 = vmul.f32 %v304, 0.01
    %v338 = vmul.f32 %v306, 0.01
    %v339 = vmul.f32 %v309, 0.01
    %v340 = vmul.f32 %v311, 0.01
    %v341 = vmul.f32 %v314, 0.01
    %v342 = vmul.f32 %v316, 0.01
    %v343 = vmul.f32 %v319, 0.01
    %v344 = vmul.f32 %v321, 0.01
    %v345 = vmul.f32 %v324, 0.01
    %v346 = vmul.f32 %v326, 0.01
    %v347 = vmul.f32 %v329, 0.01
    %v348 = vmul.f32 %v331, 0.01
    %v349 = vmax.f32 %v294, %v333
    %v350 = vmax.f32 %v296, %v334
    %v351 = vmax.f32 %v299, %v335
    %v352 = vmax.f32 %v301, %v336
    %v353 = vmax.f32 %v304, %v337
    %v354 = vmax.f32 %v306, %v338
    %v355 = vmax.f32 %v309, %v339
    %v356 = vmax.f32 %v311, %v340
    %v357 = vmax.f32 %v314, %v341
    %v358 = vmax.f32 %v316, %v342
    %v359 = vmax.f32 %v319, %v343
    %v360 = vmax.f32 %v321, %v344
    %v361 = vmax.f32 %v324, %v345
    %v362 = vmax.f32 %v326, %v346
    %v363 = vmax.f32 %v329, %v347
    %v364 = vmax.f32 %v331, %v348
    %v365 = vpack.c.bf16 %v349, %v349
    %v366 = vpack.c.bf16 %v350, %v350
    %v367 = vpack.c.bf16 %v351, %v351
    %v368 = vpack.c.bf16 %v352, %v352
    %v369 = vpack.c.bf16 %v353, %v353
    %v370 = vpack.c.bf16 %v354, %v354
    %v371 = vpack.c.bf16 %v355, %v355
    %v372 = vpack.c.bf16 %v356, %v356
    %v373 = vpack.c.bf16 %v357, %v357
    %v374 = vpack.c.bf16 %v358, %v358
    %v375 = vpack.c.bf16 %v359, %v359
    %v376 = vpack.c.bf16 %v360, %v360
    %v377 = vpack.c.bf16 %v361, %v361
    %v378 = vpack.c.bf16 %v362, %v362
    %v379 = vpack.c.bf16 %v363, %v363
    %v380 = vpack.c.bf16 %v364, %v364
    %v381 = vld [vmem:[%s5] sm:$0x1]
    %v382 = vld [vmem:[%s6] sm:$0x1]
    %v399 = vunpack.c.l.b16 %v365
    %v400 = vunpack.c.l.b16 %v366
    %v401 = vunpack.c.l.b16 %v367
    %v402 = vunpack.c.l.b16 %v368
    %v403 = vunpack.c.l.b16 %v369
    %v404 = vunpack.c.l.b16 %v370
    %v405 = vunpack.c.l.b16 %v371
    %v406 = vunpack.c.l.b16 %v372
    %v407 = vunpack.c.l.b16 %v373
    %v408 = vunpack.c.l.b16 %v374
    %v409 = vunpack.c.l.b16 %v375
    %v410 = vunpack.c.l.b16 %v376
    %v411 = vunpack.c.l.b16 %v377
    %v412 = vunpack.c.l.b16 %v378
    %v413 = vunpack.c.l.b16 %v379
    %v414 = vunpack.c.l.b16 %v380
    %v415 = vpack.c.b16 %v400, %v399
    %v416 = vpack.c.b16 %v402, %v401
    %v417 = vpack.c.b16 %v404, %v403
    %v418 = vpack.c.b16 %v406, %v405
    %v419 = vpack.c.b16 %v408, %v407
    %v420 = vpack.c.b16 %v410, %v409
    %v421 = vpack.c.b16 %v412, %v411
    %v422 = vpack.c.b16 %v414, %v413
    %431 = vmatpush.bf16.xpose.msra.mxu0 %v422
    %432 = vmatpush.bf16.xpose.msra.mxu0 %v421
    %433 = vmatpush.bf16.xpose.msra.mxu0 %v420
    %434 = vmatpush.bf16.xpose.msra.mxu0 %v419
    %435 = vmatpush.bf16.xpose.msra.mxu0 %v418
    %436 = vmatpush.bf16.xpose.msra.mxu0 %v417
    %437 = vmatpush.bf16.xpose.msra.mxu0 %v416
    %438 = vmatpush.bf16.xpose.msra.mxu0 %v415
    %439 = vmatmul.bf16.gmra.mxu0 %v381
    %v440 = vpop.f32.mrf.mxu0
    %v441 = vadd.f32 %v382, %v440
    %v442 = vpop.f32.mrf.mxu0
    %443 = vdwg.mxu0
    %444 = vst [vmem:[#allocation2] sm:$0x1] %v441
    // Predicated region
    $region30: #{tpu_custom_call.1} parent=1 // pred_check
      _
    $region31: #{tpu_custom_call.1} parent=1 // pred_check_branch
      %446 = sbr.rel (0) target = $region33
    $region32: #{tpu_custom_call.1} parent=1 // pred_region
      %448 = vsyncadd [#allocation3], 0
      %s450 = sshll.u32 [#allocation2], 4
      %s451 = int_to_ptr.vmem [resolvable:$true] %s450
      %s452 = sshll.u32 %s7, 4
      %s453 = int_to_ptr.hbm [resolvable:$true] %s452
      %455 = dma.vmem_to_hbm [thread:$0]  %s451, 16, %s453, [#allocation3]
    $region33: #{tpu_custom_call.1} parent=1 // pred_fallthru
      _
    // Predicated region
    $region34: #{tpu_custom_call.1} parent=1 // pred_check
      _
    $region35: #{tpu_custom_call.1} parent=1 // pred_check_branch
      %457 = sbr.rel (0) target = $region37
    $region36: #{tpu_custom_call.1} parent=1 // pred_region
      %459 = dma.done [#allocation3], 16
    $region37: #{tpu_custom_call.1} parent=1 // pred_fallthru
      _
    %460 = vsyncpa [#allocation3], 1

</llo_original>
